<compile_context>
chip_gen: v5e
topology: v5e:2x2
jax: 0.10.0
libtpu: 0.0.40
codegen_flags: <defaults>
</compile_context>

<pallas_src>
import functools

import jax
import jax.numpy as jnp
import numpy as np
from jax import lax
from jax.experimental import pallas as pl
from jax.experimental.pallas import tpu as pltpu


def _round_up(x, m):
    return (x + m - 1) // m * m


def _pick_b_tile(n, p, lane_target):
    """Largest divisor of n whose lane footprint (d*p) fits the lane target."""
    best = 1
    for d in range(1, n + 1):
        if n % d == 0 and d * p <= max(lane_target, p):
            best = d
    return best


def _im2col(cols_ref, act, width, p_img):
    """Transposed im2col of a 3x3 / stride-1 / pad-1 conv, batch on the lane axis.

    act:      (C, B*P) f32, C a multiple of 8, lanes ordered image-major then h*W+w.
    cols_ref: (9*C, B*P) f32 scratch.  Afterwards
              cols_ref[t*C + c, b*P + p] == act[c, b*P + p + s_t] when tap t lands
              inside image b at destination pixel p, else 0 (the conv zero padding).
    The spatial shift is a pltpu.roll (XLU slot) and all edge handling (including the
    roll's wrap across image boundaries) is a single lane-iota select per tap, so
    every store is a full-width, (8,128)-tile-aligned, unmasked write.
    """
    c, bp = act.shape
    lane = lax.broadcasted_iota(jnp.int32, (c, bp), 1)
    pos = (lane & (p_img - 1)) if (p_img & (p_img - 1)) == 0 else (lane % p_img)
    col = (pos & (width - 1)) if (width & (width - 1)) == 0 else (pos % width)
    top_ok = pos >= width              # destination row h >= 1
    bot_ok = pos < p_img - width       # destination row h <= H-2
    left_ok = col >= 1                 # destination col w >= 1
    right_ok = col <= width - 2        # destination col w <= W-2
    zero = jnp.zeros_like(act)

    for ky in range(3):
        for kx in range(3):
            dy, dx = ky - 1, kx - 1
            t = ky * 3 + kx
            s = dy * width + dx
            v = act if s == 0 else pltpu.roll(act, (-s) % bp, axis=1)
            m = None
            if dy < 0:
                m = top_ok
            elif dy > 0:
                m = bot_ok
            if dx < 0:
                m = left_ok if m is None else m & left_ok
            elif dx > 0:
                m = right_ok if m is None else m & right_ok
            cols_ref[t * c:(t + 1) * c, :] = v if m is None else jnp.where(m, v, zero)


def _preact_block_kernel(x_ref, s1_ref, b1_ref, s2_ref, b2_ref, w1c_ref, w2_ref,
                         relu1_ref, relu2_ref, out_ref, cols1_ref, cols2_ref,
                         *, width, p_img, cin, cout, cout_p, b_tile):
    # ---- bn1 (inference-mode affine) + relu on the batch-concatenated slab ------
    if b_tile > 1:
        x = jnp.concatenate([x_ref[b] for b in range(b_tile)], axis=-1)  # (Cin_p, B*P)
    else:
        x = x_ref[0]
    relu1 = jnp.maximum(x * s1_ref[...] + b1_ref[...], 0.0)
    for b in range(b_tile):                                  # lane-dense bf16 stores
        relu1_ref[b] = relu1[:cin, b * p_img:(b + 1) * p_img].astype(relu1_ref.dtype)

    # ---- conv1 (3x3) + 1x1 shortcut fused into ONE bf16 MXU matmul --------------
    _im2col(cols1_ref, relu1, width, p_img)
    m1 = jnp.dot(w1c_ref[...], cols1_ref[...].astype(jnp.bfloat16),
                 preferred_element_type=jnp.float32)         # (2*Cout_p, B*P)
    conv1, shortcut = m1[:cout_p], m1[cout_p:]

    # ---- bn2 + relu --------------------------------------------------------------
    relu2 = jnp.maximum(conv1 * s2_ref[...] + b2_ref[...], 0.0)
    for b in range(b_tile):
        relu2_ref[b] = relu2[:cout, b * p_img:(b + 1) * p_img].astype(relu2_ref.dtype)

    # ---- conv2 (3x3) + residual add ----------------------------------------------
    _im2col(cols2_ref, relu2, width, p_img)
    conv2 = jnp.dot(w2_ref[...], cols2_ref[...].astype(jnp.bfloat16),
                    preferred_element_type=jnp.float32)      # (Cout_p, B*P)
    out = conv2 + shortcut
    for b in range(b_tile):
        out_ref[b] = out[:cout, b * p_img:(b + 1) * p_img]


def preact_block_forward(x_nchw, params, eps=1e-5, *, lane_target=512,
                         b_tile=None, intermediates_dtype=jnp.bfloat16):
    """PreActBlock forward (stride=1). Returns (relu1, relu2, out) in NCHW.

    relu1/relu2 are emitted in `intermediates_dtype` (bf16 by default, per the perf
    review -- they dominate HBM writeback); pass jnp.float32 for exact f32 stores.
    """
    n, cin, h, w = x_nchw.shape
    p = h * w
    cout = params["conv1_w"].shape[0]
    cin_p, cout_p = _round_up(cin, 8), _round_up(cout, 8)
    if b_tile is None:
        b_tile = _pick_b_tile(n, p, lane_target)
    assert n % b_tile == 0, "b_tile must divide the batch"

    w1 = params["conv1_w"]          # (Cout, Cin, 3, 3)  OIHW (PyTorch layout)
    w2 = params["conv2_w"]          # (Cout, Cout, 3, 3)
    wsc = params["shortcut_w"]      # (Cout, Cin, 1, 1)

    # Fold BatchNorm (inference mode) into per-channel scale/bias.
    s1 = params["bn1_gamma"] * lax.rsqrt(params["bn1_var"] + eps)
    b1 = params["bn1_beta"] - params["bn1_mean"] * s1
    s2 = params["bn2_gamma"] * lax.rsqrt(params["bn2_var"] + eps)
    b2 = params["bn2_beta"] - params["bn2_mean"] * s2

    # Pack weights for the transposed im2col matmuls (bf16 MXU operands).
    # K-axis order is (ky, kx, c_in_padded), matching _im2col's row order; padded
    # input channels get zero K-columns, padded output channels get zero rows.
    w1_2d = jnp.pad(jnp.transpose(w1, (0, 2, 3, 1)),
                    ((0, cout_p - cout), (0, 0), (0, 0), (0, cin_p - cin))
                    ).reshape(cout_p, 9 * cin_p)
    wsc_2d = jnp.zeros((cout_p, 9 * cin_p), w1.dtype).at[
        :cout, 4 * cin_p:4 * cin_p + cin].set(wsc.reshape(cout, cin))  # center tap
    w1cat = jnp.concatenate([w1_2d, wsc_2d], axis=0).astype(jnp.bfloat16)
    w2_2d = jnp.pad(jnp.transpose(w2, (0, 2, 3, 1)),
                    ((0, cout_p - cout), (0, 0), (0, 0), (0, cout_p - cout))
                    ).reshape(cout_p, 9 * cout_p).astype(jnp.bfloat16)

    # NCHW -> (N, C, H*W) is a free reshape; pad C up to a sublane multiple in the
    # wrapper so every in-kernel tap block / BN vreg is a full (8,128) tile.
    x3 = x_nchw.reshape(n, cin, p).astype(jnp.float32)
    if cin_p != cin:
        x3 = jnp.pad(x3, ((0, 0), (0, cin_p - cin), (0, 0)))
    s1_ = jnp.pad(s1, (0, cin_p - cin), constant_values=1.0
                  ).reshape(cin_p, 1).astype(jnp.float32)
    b1_ = jnp.pad(b1, (0, cin_p - cin)).reshape(cin_p, 1).astype(jnp.float32)
    s2_ = jnp.pad(s2, (0, cout_p - cout), constant_values=1.0
                  ).reshape(cout_p, 1).astype(jnp.float32)
    b2_ = jnp.pad(b2, (0, cout_p - cout)).reshape(cout_p, 1).astype(jnp.float32)

    kernel = functools.partial(_preact_block_kernel, width=w, p_img=p, cin=cin,
                               cout=cout, cout_p=cout_p, b_tile=b_tile)

    grid = (n // b_tile,)
    it_sz = jnp.dtype(intermediates_dtype).itemsize
    flops = 2 * n * p * (2 * cout_p * 9 * cin_p + cout_p * 9 * cout_p)
    bytes_accessed = (4 * x3.size + it_sz * n * p * (cin + cout) + 4 * n * cout * p
                      + 2 * (w1cat.size + w2_2d.size) + 4 * 2 * (cin_p + cout_p))

    relu1, relu2, out = pl.pallas_call(
        kernel,
        grid=grid,
        in_specs=[
            pl.BlockSpec((b_tile, cin_p, p), lambda i: (i, 0, 0)),     # x (padded C)
            pl.BlockSpec((cin_p, 1), lambda i: (0, 0)),                # bn1 scale
            pl.BlockSpec((cin_p, 1), lambda i: (0, 0)),                # bn1 bias
            pl.BlockSpec((cout_p, 1), lambda i: (0, 0)),               # bn2 scale
            pl.BlockSpec((cout_p, 1), lambda i: (0, 0)),               # bn2 bias
            pl.BlockSpec((2 * cout_p, 9 * cin_p), lambda i: (0, 0)),   # conv1+shortcut W
            pl.BlockSpec((cout_p, 9 * cout_p), lambda i: (0, 0)),      # conv2 W
        ],
        out_specs=(
            pl.BlockSpec((b_tile, cin, p), lambda i: (i, 0, 0)),
            pl.BlockSpec((b_tile, cout, p), lambda i: (i, 0, 0)),
            pl.BlockSpec((b_tile, cout, p), lambda i: (i, 0, 0)),
        ),
        out_shape=(
            jax.ShapeDtypeStruct((n, cin, p), intermediates_dtype),    # relu1
            jax.ShapeDtypeStruct((n, cout, p), intermediates_dtype),   # relu2
            jax.ShapeDtypeStruct((n, cout, p), jnp.float32),           # out
        ),
        scratch_shapes=[
            pltpu.VMEM((9 * cin_p, b_tile * p), jnp.float32),          # im2col conv1
            pltpu.VMEM((9 * cout_p, b_tile * p), jnp.float32),         # im2col conv2
        ],
        compiler_params=pltpu.CompilerParams(
            dimension_semantics=("parallel",)),
        cost_estimate=pl.CostEstimate(flops=int(flops), transcendentals=0,
                                      bytes_accessed=int(bytes_accessed)),
    )(x3, s1_, b1_, s2_, b2_, w1cat, w2_2d)

    return (relu1.reshape(n, cin, h, w),
            relu2.reshape(n, cout, h, w),
            out.reshape(n, cout, h, w))


def reference_forward(x_nchw, params, eps=1e-5):
    """Pure-JAX/XLA reference using the same bf16 matmul operands as the kernel."""
    cin = x_nchw.shape[1]
    cout = params["conv1_w"].shape[0]
    s1 = params["bn1_gamma"] * lax.rsqrt(params["bn1_var"] + eps)
    b1 = params["bn1_beta"] - params["bn1_mean"] * s1
    s2 = params["bn2_gamma"] * lax.rsqrt(params["bn2_var"] + eps)
    b2 = params["bn2_beta"] - params["bn2_mean"] * s2

    x = x_nchw.astype(jnp.float32)
    relu1 = jnp.maximum(x * s1.reshape(1, cin, 1, 1) + b1.reshape(1, cin, 1, 1), 0.0)
    r1b = relu1.astype(jnp.bfloat16)
    dn = ("NCHW", "OIHW", "NCHW")
    sc = lax.conv_general_dilated(
        r1b, params["shortcut_w"].astype(jnp.bfloat16), (1, 1), "VALID",
        dimension_numbers=dn, preferred_element_type=jnp.float32)
    c1 = lax.conv_general_dilated(
        r1b, params["conv1_w"].astype(jnp.bfloat16), (1, 1), ((1, 1), (1, 1)),
        dimension_numbers=dn, preferred_element_type=jnp.float32)
    relu2 = jnp.maximum(c1 * s2.reshape(1, cout, 1, 1) + b2.reshape(1, cout, 1, 1), 0.0)
    c2 = lax.conv_general_dilated(
        relu2.astype(jnp.bfloat16), params["conv2_w"].astype(jnp.bfloat16),
        (1, 1), ((1, 1), (1, 1)), dimension_numbers=dn,
        preferred_element_type=jnp.float32)
    return relu1, relu2, c2 + sc


if __name__ == "__main__":
    # Small shapes consistent with the module: in_planes=4, planes=8, stride=1.
    N, CIN, H, W = 2, 4, 16, 16
    COUT = 8

    keys = jax.random.split(jax.random.PRNGKey(0), 12)
    x = jax.random.normal(keys[0], (N, CIN, H, W), jnp.float32)
    params = dict(
        conv1_w=jax.random.normal(keys[1], (COUT, CIN, 3, 3), jnp.float32)
        * np.sqrt(2.0 / (9 * CIN)),
        conv2_w=jax.random.normal(keys[2], (COUT, COUT, 3, 3), jnp.float32)
        * np.sqrt(2.0 / (9 * COUT)),
        shortcut_w=jax.random.normal(keys[3], (COUT, CIN, 1, 1), jnp.float32)
        * np.sqrt(2.0 / CIN),
        bn1_gamma=jax.random.uniform(keys[4], (CIN,), jnp.float32, 0.5, 1.5),
        bn1_beta=0.1 * jax.random.normal(keys[5], (CIN,), jnp.float32),
        bn1_mean=0.1 * jax.random.normal(keys[6], (CIN,), jnp.float32),
        bn1_var=jax.random.uniform(keys[7], (CIN,), jnp.float32, 0.5, 1.5),
        bn2_gamma=jax.random.uniform(keys[8], (COUT,), jnp.float32, 0.5, 1.5),
        bn2_beta=0.1 * jax.random.normal(keys[9], (COUT,), jnp.float32),
        bn2_mean=0.1 * jax.random.normal(keys[10], (COUT,), jnp.float32),
        bn2_var=jax.random.uniform(keys[11], (COUT,), jnp.float32, 0.5, 1.5),
    )

    outs = jax.block_until_ready(preact_block_forward(x, params))
    refs = reference_forward(x, params)
    for got, want in zip(outs, refs):
        np.testing.assert_allclose(np.asarray(got).astype(np.float32),
                                   np.asarray(want).astype(np.float32),
                                   rtol=5e-3, atol=5e-3)
    print("KERNEL_OK")
</pallas_src>

<mosaic_0001>
module attributes {stable_mosaic.version = 11 : i64} {
  func.func @_preact_block_kernel(%arg0: i32, %arg1: memref<2x8x256xf32, #tpu.memory_space<vmem>>, %arg2: memref<8x1xf32, #tpu.memory_space<vmem>>, %arg3: memref<8x1xf32, #tpu.memory_space<vmem>>, %arg4: memref<8x1xf32, #tpu.memory_space<vmem>>, %arg5: memref<8x1xf32, #tpu.memory_space<vmem>>, %arg6: memref<16x72xbf16, #tpu.memory_space<vmem>>, %arg7: memref<8x72xbf16, #tpu.memory_space<vmem>>, %arg8: memref<2x4x256xbf16, #tpu.memory_space<vmem>>, %arg9: memref<2x8x256xbf16, #tpu.memory_space<vmem>>, %arg10: memref<2x8x256xf32, #tpu.memory_space<vmem>>, %arg11: memref<72x512xf32, #tpu.memory_space<vmem>>, %arg12: memref<72x512xf32, #tpu.memory_space<vmem>>) attributes {dimension_semantics = [#tpu.dimension_semantics<parallel>], iteration_bounds = array<i64: 1>, scalar_prefetch = 0 : i64, scratch_operands = 2 : i64, tpu.core_type = #tpu.core_type<tc>, window_params = [{transform_indices = @transform_0, window_bounds = array<i64: 2, 8, 256>}, {pipeline_mode = #tpu.pipeline_mode<synchronous>, transform_indices = @transform_1, window_bounds = array<i64: 8, 1>}, {pipeline_mode = #tpu.pipeline_mode<synchronous>, transform_indices = @transform_2, window_bounds = array<i64: 8, 1>}, {pipeline_mode = #tpu.pipeline_mode<synchronous>, transform_indices = @transform_3, window_bounds = array<i64: 8, 1>}, {pipeline_mode = #tpu.pipeline_mode<synchronous>, transform_indices = @transform_4, window_bounds = array<i64: 8, 1>}, {pipeline_mode = #tpu.pipeline_mode<synchronous>, transform_indices = @transform_5, window_bounds = array<i64: 16, 72>}, {pipeline_mode = #tpu.pipeline_mode<synchronous>, transform_indices = @transform_6, window_bounds = array<i64: 8, 72>}, {transform_indices = @transform_7, window_bounds = array<i64: 2, 4, 256>}, {transform_indices = @transform_8, window_bounds = array<i64: 2, 8, 256>}, {transform_indices = @transform_9, window_bounds = array<i64: 2, 8, 256>}]} {
    %c0 = arith.constant 0 : index
    %c0_0 = arith.constant 0 : index
    %c0_1 = arith.constant 0 : index
    %0 = vector.load %arg1[%c0, %c0_0, %c0_1] : memref<2x8x256xf32, #tpu.memory_space<vmem>>, vector<1x8x256xf32>
    %1 = vector.shape_cast %0 : vector<1x8x256xf32> to vector<8x256xf32>
    %c1 = arith.constant 1 : index
    %c0_2 = arith.constant 0 : index
    %c0_3 = arith.constant 0 : index
    %2 = vector.load %arg1[%c1, %c0_2, %c0_3] : memref<2x8x256xf32, #tpu.memory_space<vmem>>, vector<1x8x256xf32>
    %3 = vector.shape_cast %2 : vector<1x8x256xf32> to vector<8x256xf32>
    %4 = tpu.concatenate %1, %3 in 1 : vector<8x256xf32>, vector<8x256xf32> -> vector<8x512xf32>
    %c0_4 = arith.constant 0 : index
    %c0_5 = arith.constant 0 : index
    %5 = vector.load %arg2[%c0_4, %c0_5] : memref<8x1xf32, #tpu.memory_space<vmem>>, vector<8x1xf32>
    %6 = vector.broadcast %5 : vector<8x1xf32> to vector<8x512xf32>
    %7 = arith.mulf %4, %6 : vector<8x512xf32>
    %c0_6 = arith.constant 0 : index
    %c0_7 = arith.constant 0 : index
    %8 = vector.load %arg3[%c0_6, %c0_7] : memref<8x1xf32, #tpu.memory_space<vmem>>, vector<8x1xf32>
    %9 = vector.broadcast %8 : vector<8x1xf32> to vector<8x512xf32>
    %10 = arith.addf %7, %9 : vector<8x512xf32>
    %cst = arith.constant 0.000000e+00 : f32
    %11 = vector.broadcast %cst : f32 to vector<8x512xf32>
    %12 = arith.maximumf %10, %11 : vector<8x512xf32>
    %13 = vector.extract_strided_slice %12 {offsets = [0, 0], sizes = [4, 256], strides = [1, 1]} : vector<8x512xf32> to vector<4x256xf32>
    %14 = arith.truncf %13 : vector<4x256xf32> to vector<4x256xbf16>
    %c0_8 = arith.constant 0 : index
    %c0_9 = arith.constant 0 : index
    %c0_10 = arith.constant 0 : index
    %15 = vector.load %arg8[%c0_8, %c0_9, %c0_10] : memref<2x4x256xbf16, #tpu.memory_space<vmem>>, vector<1x4x256xbf16>
    %16 = vector.shape_cast %15 : vector<1x4x256xbf16> to vector<4x256xbf16>
    %17 = vector.shape_cast %14 : vector<4x256xbf16> to vector<1x4x256xbf16>
    tpu.vector_store %arg8[%c0_8, %c0_9, %c0_10], %17 {strides = array<i32>} : memref<2x4x256xbf16, #tpu.memory_space<vmem>>, vector<1x4x256xbf16>,
    %18 = vector.extract_strided_slice %12 {offsets = [0, 256], sizes = [4, 256], strides = [1, 1]} : vector<8x512xf32> to vector<4x256xf32>
    %19 = arith.truncf %18 : vector<4x256xf32> to vector<4x256xbf16>
    %c1_11 = arith.constant 1 : index
    %c0_12 = arith.constant 0 : index
    %c0_13 = arith.constant 0 : index
    %20 = vector.load %arg8[%c1_11, %c0_12, %c0_13] : memref<2x4x256xbf16, #tpu.memory_space<vmem>>, vector<1x4x256xbf16>
    %21 = vector.shape_cast %20 : vector<1x4x256xbf16> to vector<4x256xbf16>
    %22 = vector.shape_cast %19 : vector<4x256xbf16> to vector<1x4x256xbf16>
    tpu.vector_store %arg8[%c1_11, %c0_12, %c0_13], %22 {strides = array<i32>} : memref<2x4x256xbf16, #tpu.memory_space<vmem>>, vector<1x4x256xbf16>,
    %23 = tpu.iota {dimensions = array<i32: 1>} : vector<8x512xi32>
    %c255_i32 = arith.constant 255 : i32
    %24 = vector.broadcast %c255_i32 : i32 to vector<8x512xi32>
    %25 = arith.andi %23, %24 : vector<8x512xi32>
    %c15_i32 = arith.constant 15 : i32
    %26 = vector.broadcast %c15_i32 : i32 to vector<8x512xi32>
    %27 = arith.andi %25, %26 : vector<8x512xi32>
    %c16_i32 = arith.constant 16 : i32
    %28 = vector.broadcast %c16_i32 : i32 to vector<8x512xi32>
    %29 = arith.cmpi sge, %25, %28 : vector<8x512xi32>
    %c240_i32 = arith.constant 240 : i32
    %30 = vector.broadcast %c240_i32 : i32 to vector<8x512xi32>
    %31 = arith.cmpi slt, %25, %30 : vector<8x512xi32>
    %c1_i32 = arith.constant 1 : i32
    %32 = vector.broadcast %c1_i32 : i32 to vector<8x512xi32>
    %33 = arith.cmpi sge, %27, %32 : vector<8x512xi32>
    %c14_i32 = arith.constant 14 : i32
    %34 = vector.broadcast %c14_i32 : i32 to vector<8x512xi32>
    %35 = arith.cmpi sle, %27, %34 : vector<8x512xi32>
    %cst_14 = arith.constant 0.000000e+00 : f32
    %36 = vector.broadcast %cst_14 : f32 to vector<8x512xf32>
    %c17_i32 = arith.constant 17 : i32
    %37 = tpu.dynamic_rotate %12 by %c17_i32 dim 1 : vector<8x512xf32>, i32 -> vector<8x512xf32>
    %38 = arith.andi %29, %33 : vector<8x512xi1>
    %39 = arith.select %38, %37, %36 : vector<8x512xi1>, vector<8x512xf32>
    %c0_15 = arith.constant 0 : index
    %c0_16 = arith.constant 0 : index
    %40 = vector.load %arg11[%c0_15, %c0_16] : memref<72x512xf32, #tpu.memory_space<vmem>>, vector<8x512xf32>
    tpu.vector_store %arg11[%c0_15, %c0_16], %39 {strides = array<i32>} : memref<72x512xf32, #tpu.memory_space<vmem>>, vector<8x512xf32>,
    %c16_i32_17 = arith.constant 16 : i32
    %41 = tpu.dynamic_rotate %12 by %c16_i32_17 dim 1 : vector<8x512xf32>, i32 -> vector<8x512xf32>
    %42 = arith.select %29, %41, %36 : vector<8x512xi1>, vector<8x512xf32>
    %c8 = arith.constant 8 : index
    %c0_18 = arith.constant 0 : index
    %43 = vector.load %arg11[%c8, %c0_18] : memref<72x512xf32, #tpu.memory_space<vmem>>, vector<8x512xf32>
    tpu.vector_store %arg11[%c8, %c0_18], %42 {strides = array<i32>} : memref<72x512xf32, #tpu.memory_space<vmem>>, vector<8x512xf32>,
    %c15_i32_19 = arith.constant 15 : i32
    %44 = tpu.dynamic_rotate %12 by %c15_i32_19 dim 1 : vector<8x512xf32>, i32 -> vector<8x512xf32>
    %45 = arith.andi %29, %35 : vector<8x512xi1>
    %46 = arith.select %45, %44, %36 : vector<8x512xi1>, vector<8x512xf32>
    %c16 = arith.constant 16 : index
    %c0_20 = arith.constant 0 : index
    %47 = vector.load %arg11[%c16, %c0_20] : memref<72x512xf32, #tpu.memory_space<vmem>>, vector<8x512xf32>
    tpu.vector_store %arg11[%c16, %c0_20], %46 {strides = array<i32>} : memref<72x512xf32, #tpu.memory_space<vmem>>, vector<8x512xf32>,
    %c1_i32_21 = arith.constant 1 : i32
    %48 = tpu.dynamic_rotate %12 by %c1_i32_21 dim 1 : vector<8x512xf32>, i32 -> vector<8x512xf32>
    %49 = arith.select %33, %48, %36 : vector<8x512xi1>, vector<8x512xf32>
    %c24 = arith.constant 24 : index
    %c0_22 = arith.constant 0 : index
    %50 = vector.load %arg11[%c24, %c0_22] : memref<72x512xf32, #tpu.memory_space<vmem>>, vector<8x512xf32>
    tpu.vector_store %arg11[%c24, %c0_22], %49 {strides = array<i32>} : memref<72x512xf32, #tpu.memory_space<vmem>>, vector<8x512xf32>,
    %c32 = arith.constant 32 : index
    %c0_23 = arith.constant 0 : index
    %51 = vector.load %arg11[%c32, %c0_23] : memref<72x512xf32, #tpu.memory_space<vmem>>, vector<8x512xf32>
    tpu.vector_store %arg11[%c32, %c0_23], %12 {strides = array<i32>} : memref<72x512xf32, #tpu.memory_space<vmem>>, vector<8x512xf32>,
    %c511_i32 = arith.constant 511 : i32
    %52 = tpu.dynamic_rotate %12 by %c511_i32 dim 1 : vector<8x512xf32>, i32 -> vector<8x512xf32>
    %53 = arith.select %35, %52, %36 : vector<8x512xi1>, vector<8x512xf32>
    %c40 = arith.constant 40 : index
    %c0_24 = arith.constant 0 : index
    %54 = vector.load %arg11[%c40, %c0_24] : memref<72x512xf32, #tpu.memory_space<vmem>>, vector<8x512xf32>
    tpu.vector_store %arg11[%c40, %c0_24], %53 {strides = array<i32>} : memref<72x512xf32, #tpu.memory_space<vmem>>, vector<8x512xf32>,
    %c497_i32 = arith.constant 497 : i32
    %55 = tpu.dynamic_rotate %12 by %c497_i32 dim 1 : vector<8x512xf32>, i32 -> vector<8x512xf32>
    %56 = arith.andi %31, %33 : vector<8x512xi1>
    %57 = arith.select %56, %55, %36 : vector<8x512xi1>, vector<8x512xf32>
    %c48 = arith.constant 48 : index
    %c0_25 = arith.constant 0 : index
    %58 = vector.load %arg11[%c48, %c0_25] : memref<72x512xf32, #tpu.memory_space<vmem>>, vector<8x512xf32>
    tpu.vector_store %arg11[%c48, %c0_25], %57 {strides = array<i32>} : memref<72x512xf32, #tpu.memory_space<vmem>>, vector<8x512xf32>,
    %c496_i32 = arith.constant 496 : i32
    %59 = tpu.dynamic_rotate %12 by %c496_i32 dim 1 : vector<8x512xf32>, i32 -> vector<8x512xf32>
    %60 = arith.select %31, %59, %36 : vector<8x512xi1>, vector<8x512xf32>
    %c56 = arith.constant 56 : index
    %c0_26 = arith.constant 0 : index
    %61 = vector.load %arg11[%c56, %c0_26] : memref<72x512xf32, #tpu.memory_space<vmem>>, vector<8x512xf32>
    tpu.vector_store %arg11[%c56, %c0_26], %60 {strides = array<i32>} : memref<72x512xf32, #tpu.memory_space<vmem>>, vector<8x512xf32>,
    %c495_i32 = arith.constant 495 : i32
    %62 = tpu.dynamic_rotate %12 by %c495_i32 dim 1 : vector<8x512xf32>, i32 -> vector<8x512xf32>
    %63 = arith.andi %31, %35 : vector<8x512xi1>
    %64 = arith.select %63, %62, %36 : vector<8x512xi1>, vector<8x512xf32>
    %c64 = arith.constant 64 : index
    %c0_27 = arith.constant 0 : index
    %65 = vector.load %arg11[%c64, %c0_27] : memref<72x512xf32, #tpu.memory_space<vmem>>, vector<8x512xf32>
    tpu.vector_store %arg11[%c64, %c0_27], %64 {strides = array<i32>} : memref<72x512xf32, #tpu.memory_space<vmem>>, vector<8x512xf32>,
    %c0_28 = arith.constant 0 : index
    %c0_29 = arith.constant 0 : index
    %66 = vector.load %arg6[%c0_28, %c0_29] : memref<16x72xbf16, #tpu.memory_space<vmem>>, vector<16x72xbf16>
    %c0_30 = arith.constant 0 : index
    %c0_31 = arith.constant 0 : index
    %67 = vector.load %arg11[%c0_30, %c0_31] : memref<72x512xf32, #tpu.memory_space<vmem>>, vector<72x512xf32>
    %68 = arith.truncf %67 : vector<72x512xf32> to vector<72x512xbf16>
    %cst_32 = arith.constant dense<0.000000e+00> : vector<16x512xf32>
    %69 = tpu.matmul %66, %68, %cst_32 {dimension_numbers = #tpu.dot_dimension_numbers<[1], [0], [0], [1], [0, 0, 1, 1], [], []>} : vector<16x72xbf16>, vector<72x512xbf16>, vector<16x512xf32> -> vector<16x512xf32>
    %70 = vector.extract_strided_slice %69 {offsets = [0, 0], sizes = [8, 512], strides = [1, 1]} : vector<16x512xf32> to vector<8x512xf32>
    %71 = vector.extract_strided_slice %69 {offsets = [8, 0], sizes = [8, 512], strides = [1, 1]} : vector<16x512xf32> to vector<8x512xf32>
    %c0_33 = arith.constant 0 : index
    %c0_34 = arith.constant 0 : index
    %72 = vector.load %arg4[%c0_33, %c0_34] : memref<8x1xf32, #tpu.memory_space<vmem>>, vector<8x1xf32>
    %73 = vector.broadcast %72 : vector<8x1xf32> to vector<8x512xf32>
    %74 = arith.mulf %70, %73 : vector<8x512xf32>
    %c0_35 = arith.constant 0 : index
    %c0_36 = arith.constant 0 : index
    %75 = vector.load %arg5[%c0_35, %c0_36] : memref<8x1xf32, #tpu.memory_space<vmem>>, vector<8x1xf32>
    %76 = vector.broadcast %75 : vector<8x1xf32> to vector<8x512xf32>
    %77 = arith.addf %74, %76 : vector<8x512xf32>
    %cst_37 = arith.constant 0.000000e+00 : f32
    %78 = vector.broadcast %cst_37 : f32 to vector<8x512xf32>
    %79 = arith.maximumf %77, %78 : vector<8x512xf32>
    %80 = vector.extract_strided_slice %79 {offsets = [0, 0], sizes = [8, 256], strides = [1, 1]} : vector<8x512xf32> to vector<8x256xf32>
    %81 = arith.truncf %80 : vector<8x256xf32> to vector<8x256xbf16>
    %c0_38 = arith.constant 0 : index
    %c0_39 = arith.constant 0 : index
    %c0_40 = arith.constant 0 : index
    %82 = vector.load %arg9[%c0_38, %c0_39, %c0_40] : memref<2x8x256xbf16, #tpu.memory_space<vmem>>, vector<1x8x256xbf16>
    %83 = vector.shape_cast %82 : vector<1x8x256xbf16> to vector<8x256xbf16>
    %84 = vector.shape_cast %81 : vector<8x256xbf16> to vector<1x8x256xbf16>
    tpu.vector_store %arg9[%c0_38, %c0_39, %c0_40], %84 {strides = array<i32>} : memref<2x8x256xbf16, #tpu.memory_space<vmem>>, vector<1x8x256xbf16>,
    %85 = vector.extract_strided_slice %79 {offsets = [0, 256], sizes = [8, 256], strides = [1, 1]} : vector<8x512xf32> to vector<8x256xf32>
    %86 = arith.truncf %85 : vector<8x256xf32> to vector<8x256xbf16>
    %c1_41 = arith.constant 1 : index
    %c0_42 = arith.constant 0 : index
    %c0_43 = arith.constant 0 : index
    %87 = vector.load %arg9[%c1_41, %c0_42, %c0_43] : memref<2x8x256xbf16, #tpu.memory_space<vmem>>, vector<1x8x256xbf16>
    %88 = vector.shape_cast %87 : vector<1x8x256xbf16> to vector<8x256xbf16>
    %89 = vector.shape_cast %86 : vector<8x256xbf16> to vector<1x8x256xbf16>
    tpu.vector_store %arg9[%c1_41, %c0_42, %c0_43], %89 {strides = array<i32>} : memref<2x8x256xbf16, #tpu.memory_space<vmem>>, vector<1x8x256xbf16>,
    %90 = tpu.iota {dimensions = array<i32: 1>} : vector<8x512xi32>
    %c255_i32_44 = arith.constant 255 : i32
    %91 = vector.broadcast %c255_i32_44 : i32 to vector<8x512xi32>
    %92 = arith.andi %90, %91 : vector<8x512xi32>
    %c15_i32_45 = arith.constant 15 : i32
    %93 = vector.broadcast %c15_i32_45 : i32 to vector<8x512xi32>
    %94 = arith.andi %92, %93 : vector<8x512xi32>
    %c16_i32_46 = arith.constant 16 : i32
    %95 = vector.broadcast %c16_i32_46 : i32 to vector<8x512xi32>
    %96 = arith.cmpi sge, %92, %95 : vector<8x512xi32>
    %c240_i32_47 = arith.constant 240 : i32
    %97 = vector.broadcast %c240_i32_47 : i32 to vector<8x512xi32>
    %98 = arith.cmpi slt, %92, %97 : vector<8x512xi32>
    %c1_i32_48 = arith.constant 1 : i32
    %99 = vector.broadcast %c1_i32_48 : i32 to vector<8x512xi32>
    %100 = arith.cmpi sge, %94, %99 : vector<8x512xi32>
    %c14_i32_49 = arith.constant 14 : i32
    %101 = vector.broadcast %c14_i32_49 : i32 to vector<8x512xi32>
    %102 = arith.cmpi sle, %94, %101 : vector<8x512xi32>
    %cst_50 = arith.constant 0.000000e+00 : f32
    %103 = vector.broadcast %cst_50 : f32 to vector<8x512xf32>
    %c17_i32_51 = arith.constant 17 : i32
    %104 = tpu.dynamic_rotate %79 by %c17_i32_51 dim 1 : vector<8x512xf32>, i32 -> vector<8x512xf32>
    %105 = arith.andi %96, %100 : vector<8x512xi1>
    %106 = arith.select %105, %104, %103 : vector<8x512xi1>, vector<8x512xf32>
    %c0_52 = arith.constant 0 : index
    %c0_53 = arith.constant 0 : index
    %107 = vector.load %arg12[%c0_52, %c0_53] : memref<72x512xf32, #tpu.memory_space<vmem>>, vector<8x512xf32>
    tpu.vector_store %arg12[%c0_52, %c0_53], %106 {strides = array<i32>} : memref<72x512xf32, #tpu.memory_space<vmem>>, vector<8x512xf32>,
    %c16_i32_54 = arith.constant 16 : i32
    %108 = tpu.dynamic_rotate %79 by %c16_i32_54 dim 1 : vector<8x512xf32>, i32 -> vector<8x512xf32>
    %109 = arith.select %96, %108, %103 : vector<8x512xi1>, vector<8x512xf32>
    %c8_55 = arith.constant 8 : index
    %c0_56 = arith.constant 0 : index
    %110 = vector.load %arg12[%c8_55, %c0_56] : memref<72x512xf32, #tpu.memory_space<vmem>>, vector<8x512xf32>
    tpu.vector_store %arg12[%c8_55, %c0_56], %109 {strides = array<i32>} : memref<72x512xf32, #tpu.memory_space<vmem>>, vector<8x512xf32>,
    %c15_i32_57 = arith.constant 15 : i32
    %111 = tpu.dynamic_rotate %79 by %c15_i32_57 dim 1 : vector<8x512xf32>, i32 -> vector<8x512xf32>
    %112 = arith.andi %96, %102 : vector<8x512xi1>
    %113 = arith.select %112, %111, %103 : vector<8x512xi1>, vector<8x512xf32>
    %c16_58 = arith.constant 16 : index
    %c0_59 = arith.constant 0 : index
    %114 = vector.load %arg12[%c16_58, %c0_59] : memref<72x512xf32, #tpu.memory_space<vmem>>, vector<8x512xf32>
    tpu.vector_store %arg12[%c16_58, %c0_59], %113 {strides = array<i32>} : memref<72x512xf32, #tpu.memory_space<vmem>>, vector<8x512xf32>,
    %c1_i32_60 = arith.constant 1 : i32
    %115 = tpu.dynamic_rotate %79 by %c1_i32_60 dim 1 : vector<8x512xf32>, i32 -> vector<8x512xf32>
    %116 = arith.select %100, %115, %103 : vector<8x512xi1>, vector<8x512xf32>
    %c24_61 = arith.constant 24 : index
    %c0_62 = arith.constant 0 : index
    %117 = vector.load %arg12[%c24_61, %c0_62] : memref<72x512xf32, #tpu.memory_space<vmem>>, vector<8x512xf32>
    tpu.vector_store %arg12[%c24_61, %c0_62], %116 {strides = array<i32>} : memref<72x512xf32, #tpu.memory_space<vmem>>, vector<8x512xf32>,
    %c32_63 = arith.constant 32 : index
    %c0_64 = arith.constant 0 : index
    %118 = vector.load %arg12[%c32_63, %c0_64] : memref<72x512xf32, #tpu.memory_space<vmem>>, vector<8x512xf32>
    tpu.vector_store %arg12[%c32_63, %c0_64], %79 {strides = array<i32>} : memref<72x512xf32, #tpu.memory_space<vmem>>, vector<8x512xf32>,
    %c511_i32_65 = arith.constant 511 : i32
    %119 = tpu.dynamic_rotate %79 by %c511_i32_65 dim 1 : vector<8x512xf32>, i32 -> vector<8x512xf32>
    %120 = arith.select %102, %119, %103 : vector<8x512xi1>, vector<8x512xf32>
    %c40_66 = arith.constant 40 : index
    %c0_67 = arith.constant 0 : index
    %121 = vector.load %arg12[%c40_66, %c0_67] : memref<72x512xf32, #tpu.memory_space<vmem>>, vector<8x512xf32>
    tpu.vector_store %arg12[%c40_66, %c0_67], %120 {strides = array<i32>} : memref<72x512xf32, #tpu.memory_space<vmem>>, vector<8x512xf32>,
    %c497_i32_68 = arith.constant 497 : i32
    %122 = tpu.dynamic_rotate %79 by %c497_i32_68 dim 1 : vector<8x512xf32>, i32 -> vector<8x512xf32>
    %123 = arith.andi %98, %100 : vector<8x512xi1>
    %124 = arith.select %123, %122, %103 : vector<8x512xi1>, vector<8x512xf32>
    %c48_69 = arith.constant 48 : index
    %c0_70 = arith.constant 0 : index
    %125 = vector.load %arg12[%c48_69, %c0_70] : memref<72x512xf32, #tpu.memory_space<vmem>>, vector<8x512xf32>
    tpu.vector_store %arg12[%c48_69, %c0_70], %124 {strides = array<i32>} : memref<72x512xf32, #tpu.memory_space<vmem>>, vector<8x512xf32>,
    %c496_i32_71 = arith.constant 496 : i32
    %126 = tpu.dynamic_rotate %79 by %c496_i32_71 dim 1 : vector<8x512xf32>, i32 -> vector<8x512xf32>
    %127 = arith.select %98, %126, %103 : vector<8x512xi1>, vector<8x512xf32>
    %c56_72 = arith.constant 56 : index
    %c0_73 = arith.constant 0 : index
    %128 = vector.load %arg12[%c56_72, %c0_73] : memref<72x512xf32, #tpu.memory_space<vmem>>, vector<8x512xf32>
    tpu.vector_store %arg12[%c56_72, %c0_73], %127 {strides = array<i32>} : memref<72x512xf32, #tpu.memory_space<vmem>>, vector<8x512xf32>,
    %c495_i32_74 = arith.constant 495 : i32
    %129 = tpu.dynamic_rotate %79 by %c495_i32_74 dim 1 : vector<8x512xf32>, i32 -> vector<8x512xf32>
    %130 = arith.andi %98, %102 : vector<8x512xi1>
    %131 = arith.select %130, %129, %103 : vector<8x512xi1>, vector<8x512xf32>
    %c64_75 = arith.constant 64 : index
    %c0_76 = arith.constant 0 : index
    %132 = vector.load %arg12[%c64_75, %c0_76] : memref<72x512xf32, #tpu.memory_space<vmem>>, vector<8x512xf32>
    tpu.vector_store %arg12[%c64_75, %c0_76], %131 {strides = array<i32>} : memref<72x512xf32, #tpu.memory_space<vmem>>, vector<8x512xf32>,
    %c0_77 = arith.constant 0 : index
    %c0_78 = arith.constant 0 : index
    %133 = vector.load %arg7[%c0_77, %c0_78] : memref<8x72xbf16, #tpu.memory_space<vmem>>, vector<8x72xbf16>
    %c0_79 = arith.constant 0 : index
    %c0_80 = arith.constant 0 : index
    %134 = vector.load %arg12[%c0_79, %c0_80] : memref<72x512xf32, #tpu.memory_space<vmem>>, vector<72x512xf32>
    %135 = arith.truncf %134 : vector<72x512xf32> to vector<72x512xbf16>
    %cst_81 = arith.constant dense<0.000000e+00> : vector<8x512xf32>
    %136 = tpu.matmul %133, %135, %cst_81 {dimension_numbers = #tpu.dot_dimension_numbers<[1], [0], [0], [1], [0, 0, 1, 1], [], []>} : vector<8x72xbf16>, vector<72x512xbf16>, vector<8x512xf32> -> vector<8x512xf32>
    %137 = arith.addf %136, %71 : vector<8x512xf32>
    %138 = vector.extract_strided_slice %137 {offsets = [0, 0], sizes = [8, 256], strides = [1, 1]} : vector<8x512xf32> to vector<8x256xf32>
    %c0_82 = arith.constant 0 : index
    %c0_83 = arith.constant 0 : index
    %c0_84 = arith.constant 0 : index
    %139 = vector.load %arg10[%c0_82, %c0_83, %c0_84] : memref<2x8x256xf32, #tpu.memory_space<vmem>>, vector<1x8x256xf32>
    %140 = vector.shape_cast %139 : vector<1x8x256xf32> to vector<8x256xf32>
    %141 = vector.shape_cast %138 : vector<8x256xf32> to vector<1x8x256xf32>
    tpu.vector_store %arg10[%c0_82, %c0_83, %c0_84], %141 {strides = array<i32>} : memref<2x8x256xf32, #tpu.memory_space<vmem>>, vector<1x8x256xf32>,
    %142 = vector.extract_strided_slice %137 {offsets = [0, 256], sizes = [8, 256], strides = [1, 1]} : vector<8x512xf32> to vector<8x256xf32>
    %c1_85 = arith.constant 1 : index
    %c0_86 = arith.constant 0 : index
    %c0_87 = arith.constant 0 : index
    %143 = vector.load %arg10[%c1_85, %c0_86, %c0_87] : memref<2x8x256xf32, #tpu.memory_space<vmem>>, vector<1x8x256xf32>
    %144 = vector.shape_cast %143 : vector<1x8x256xf32> to vector<8x256xf32>
    %145 = vector.shape_cast %142 : vector<8x256xf32> to vector<1x8x256xf32>
    tpu.vector_store %arg10[%c1_85, %c0_86, %c0_87], %145 {strides = array<i32>} : memref<2x8x256xf32, #tpu.memory_space<vmem>>, vector<1x8x256xf32>,
    return
  }
  func.func @transform_0(%arg0: i32) -> (i32, i32, i32) {
    %c0_i32 = arith.constant 0 : i32
    %c0_i32_0 = arith.constant 0 : i32
    %c0_i32_1 = arith.constant 0 : i32
    return %arg0, %c0_i32, %c0_i32_0 : i32, i32, i32
  }
  func.func @transform_1(%arg0: i32) -> (i32, i32) {
    %c0_i32 = arith.constant 0 : i32
    %c0_i32_0 = arith.constant 0 : i32
    %c0_i32_1 = arith.constant 0 : i32
    return %c0_i32, %c0_i32_0 : i32, i32
  }
  func.func @transform_2(%arg0: i32) -> (i32, i32) {
    %c0_i32 = arith.constant 0 : i32
    %c0_i32_0 = arith.constant 0 : i32
    %c0_i32_1 = arith.constant 0 : i32
    return %c0_i32, %c0_i32_0 : i32, i32
  }
  func.func @transform_3(%arg0: i32) -> (i32, i32) {
    %c0_i32 = arith.constant 0 : i32
    %c0_i32_0 = arith.constant 0 : i32
    %c0_i32_1 = arith.constant 0 : i32
    return %c0_i32, %c0_i32_0 : i32, i32
  }
  func.func @transform_4(%arg0: i32) -> (i32, i32) {
    %c0_i32 = arith.constant 0 : i32
    %c0_i32_0 = arith.constant 0 : i32
    %c0_i32_1 = arith.constant 0 : i32
    return %c0_i32, %c0_i32_0 : i32, i32
  }
  func.func @transform_5(%arg0: i32) -> (i32, i32) {
    %c0_i32 = arith.constant 0 : i32
    %c0_i32_0 = arith.constant 0 : i32
    %c0_i32_1 = arith.constant 0 : i32
    return %c0_i32, %c0_i32_0 : i32, i32
  }
  func.func @transform_6(%arg0: i32) -> (i32, i32) {
    %c0_i32 = arith.constant 0 : i32
    %c0_i32_0 = arith.constant 0 : i32
    %c0_i32_1 = arith.constant 0 : i32
    return %c0_i32, %c0_i32_0 : i32, i32
  }
  func.func @transform_7(%arg0: i32) -> (i32, i32, i32) {
    %c0_i32 = arith.constant 0 : i32
    %c0_i32_0 = arith.constant 0 : i32
    %c0_i32_1 = arith.constant 0 : i32
    return %arg0, %c0_i32, %c0_i32_0 : i32, i32, i32
  }
  func.func @transform_8(%arg0: i32) -> (i32, i32, i32) {
    %c0_i32 = arith.constant 0 : i32
    %c0_i32_0 = arith.constant 0 : i32
    %c0_i32_1 = arith.constant 0 : i32
    return %arg0, %c0_i32, %c0_i32_0 : i32, i32, i32
  }
  func.func @transform_9(%arg0: i32) -> (i32, i32, i32) {
    %c0_i32 = arith.constant 0 : i32
    %c0_i32_0 = arith.constant 0 : i32
    %c0_i32_1 = arith.constant 0 : i32
    return %arg0, %c0_i32, %c0_i32_0 : i32, i32, i32
  }
}

</mosaic_0001>

<llo_original>
// kernel: tpu_custom_call.1
$region0: #{tpu_custom_call.1}
  #allocation0 [shape = 'u32[]', space=smem, size = 0x4, offset = 0x4, fixed_abs, tag = 'smem constant byte address 0x4 - core index']
  #allocation1 [shape = 'u32[72,128]{1,0:T(1,128)}', space=vmem, size = 0x9000, scoped, tag = 'internal scratch']
  #allocation2 [shape = 'f32[72,512]{1,0:T(8,128)}', space=vmem, size = 0x24000, scoped, tag = 'scratch operand']
  #allocation3 [shape = 'f32[72,512]{1,0:T(8,128)}', space=vmem, size = 0x24000, scoped, tag = 'scratch operand']
  %s0 = inlined_call_operand.vmem [shape: f32[2,8,256], index: 0, kind: input, shape index: {}]
  %s1 = inlined_call_operand.vmem [shape: f32[8,1], index: 1, kind: input, shape index: {}]
  %s2 = inlined_call_operand.vmem [shape: f32[8,1], index: 2, kind: input, shape index: {}]
  %s3 = inlined_call_operand.vmem [shape: f32[8,1], index: 3, kind: input, shape index: {}]
  %s4 = inlined_call_operand.vmem [shape: f32[8,1], index: 4, kind: input, shape index: {}]
  %s5 = inlined_call_operand.vmem [shape: bf16[16,72], index: 5, kind: input, shape index: {}]
  %s6 = inlined_call_operand.hbm [shape: bf16[8,72], index: 6, kind: input, shape index: {}]
  %s7 = inlined_call_operand.hbm [shape: bf16[2,4,256], index: 7, kind: output, shape index: {0}]
  %s8 = inlined_call_operand.hbm [shape: bf16[2,8,256], index: 8, kind: output, shape index: {1}]
  %s9 = inlined_call_operand.hbm [shape: f32[2,8,256], index: 9, kind: output, shape index: {2}]
  %10 = xla_tuple %s7, %s8, %s9
  %s11 = sld [smem:[#allocation0]]
  $region58: #{tpu_custom_call.1} parent=0
    _
  %s13 = ssub.s32 1, %s11
  %s14 = scalar_select 0, %s13, %s11
  $region1: #{tpu_custom_call.1} parent=0
    #allocation4 [shape = 'u8[2048]{0}', space=vmem, size = 0x800, scoped, tag = 'input window, operand 6, single buffered']
    #allocation5 [shape = 's32[1]{0}', space=sflag, size = 0x4, scoped, tag = 'scoped memory for tpu_custom_call.1']
    #allocation6 [shape = 's32[1]{0}', space=sflag, size = 0x4, scoped, tag = 'scoped memory for tpu_custom_call.1']
    #allocation7 [shape = 'u8[4096]{0}', space=vmem, size = 0x1000, scoped, tag = 'output window, operand 0, single buffered']
    #allocation8 [shape = 'u8[8192]{0}', space=vmem, size = 0x2000, scoped, tag = 'output window, operand 1, single buffered']
    #allocation9 [shape = 's32[1]{0}', space=sflag, size = 0x4, scoped, tag = 'scoped memory for tpu_custom_call.1']
    #allocation10 [shape = 'u8[16384]{0}', space=vmem, size = 0x4000, scoped, tag = 'output window, operand 2, single buffered']
    %15 = vsyncpa [#allocation5], 0
    %16 = vsyncpa [#allocation6], 0
    %17 = vsyncpa [#allocation9], 0
    // Predicated region
    $region2: #{tpu_custom_call.1} parent=1 // pred_check
      _
    $region3: #{tpu_custom_call.1} parent=1 // pred_check_branch
      %19 = sbr.rel (0) target = $region5
    $region4: #{tpu_custom_call.1} parent=1 // pred_region
      _
    $region5: #{tpu_custom_call.1} parent=1 // pred_fallthru
      _
    // Predicated region
    $region6: #{tpu_custom_call.1} parent=1 // pred_check
      _
    $region7: #{tpu_custom_call.1} parent=1 // pred_check_branch
      %21 = sbr.rel (0) target = $region9
    $region8: #{tpu_custom_call.1} parent=1 // pred_region
      _
    $region9: #{tpu_custom_call.1} parent=1 // pred_fallthru
      _
    // Predicated region
    $region10: #{tpu_custom_call.1} parent=1 // pred_check
      _
    $region11: #{tpu_custom_call.1} parent=1 // pred_check_branch
      %23 = sbr.rel (0) target = $region13
    $region12: #{tpu_custom_call.1} parent=1 // pred_region
      _
    $region13: #{tpu_custom_call.1} parent=1 // pred_fallthru
      _
    // Predicated region
    $region14: #{tpu_custom_call.1} parent=1 // pred_check
      _
    $region15: #{tpu_custom_call.1} parent=1 // pred_check_branch
      %25 = sbr.rel (0) target = $region17
    $region16: #{tpu_custom_call.1} parent=1 // pred_region
      _
    $region17: #{tpu_custom_call.1} parent=1 // pred_fallthru
      _
    // Predicated region
    $region18: #{tpu_custom_call.1} parent=1 // pred_check
      _
    $region19: #{tpu_custom_call.1} parent=1 // pred_check_branch
      %27 = sbr.rel (0) target = $region21
    $region20: #{tpu_custom_call.1} parent=1 // pred_region
      _
    $region21: #{tpu_custom_call.1} parent=1 // pred_fallthru
      _
    // Predicated region
    $region22: #{tpu_custom_call.1} parent=1 // pred_check
      _
    $region23: #{tpu_custom_call.1} parent=1 // pred_check_branch
      %29 = sbr.rel (0) target = $region25
    $region24: #{tpu_custom_call.1} parent=1 // pred_region
      _
    $region25: #{tpu_custom_call.1} parent=1 // pred_fallthru
      _
    // Predicated region
    $region26: #{tpu_custom_call.1} parent=1 // pred_check
      _
    $region27: #{tpu_custom_call.1} parent=1 // pred_check_branch
      %31 = sbr.rel (0) target = $region29
    $region28: #{tpu_custom_call.1} parent=1 // pred_region
      %33 = vsyncadd [#allocation5], 0
      %s35 = sshll.u32 %s6, 4
      %s36 = int_to_ptr.hbm [resolvable:$true] %s35
      %s37 = sshll.u32 [#allocation4], 4
      %s38 = int_to_ptr.vmem [resolvable:$true] %s37
      %40 = dma.hbm_to_vmem [thread:$0]  %s36, 64, %s38, [#allocation5]
    $region29: #{tpu_custom_call.1} parent=1 // pred_fallthru
      _
    // Predicated region
    $region30: #{tpu_custom_call.1} parent=1 // pred_check
      _
    $region31: #{tpu_custom_call.1} parent=1 // pred_check_branch
      %42 = sbr.rel (0) target = $region33
    $region32: #{tpu_custom_call.1} parent=1 // pred_region
      %44 = dma.done [#allocation5], 64
    $region33: #{tpu_custom_call.1} parent=1 // pred_fallthru
      _
    %v46 = vld [vmem:[%s0] sm:$0xff]
    %v47 = vld [vmem:[%s0 + $0x8] sm:$0xff]
    %s48 = scalar_lea.vmem %s0, 16
    %v49 = vld [vmem:[%s48] sm:$0xff]
    %v50 = vld [vmem:[%s48 + $0x8] sm:$0xff]
    %v51 = vld [vmem:[%s1] sm:$0xff]
    %53 = vset.pattern.permute.xlu0 0
    %54 = vperm.xlu0 %53, %v51
    %v55 = vpop.permute.xlu0 %54
    %v57 = vmul.f32 %v46, %v55
    %v58 = vmul.f32 %v47, %v55
    %v59 = vmul.f32 %v49, %v55
    %v60 = vmul.f32 %v50, %v55
    %v61 = vld [vmem:[%s2] sm:$0xff]
    %63 = vset.pattern.permute.xlu0 0
    %64 = vperm.xlu0 %63, %v61
    %v65 = vpop.permute.xlu0 %64
    %v67 = vadd.f32 %v57, %v65
    %v68 = vadd.f32 %v58, %v65
    %v69 = vadd.f32 %v59, %v65
    %v70 = vadd.f32 %v60, %v65
    %v71 = vmax.f32 %v67, 0.0
    %v72 = vmax.f32 %v68, 0.0
    %v73 = vmax.f32 %v69, 0.0
    %v74 = vmax.f32 %v70, 0.0
    %v75 = vpack.c.bf16 %v72, %v71
    %v77 = vrot.slane %v75, 2
    %vm78 = vcmask 1041408
    %v81 = vsel %vm78, %v75, %v77
    %83 = vst [vmem:[#allocation7] sm:$0xf] %v81
    %v84 = vpack.c.bf16 %v74, %v73
    %v86 = vrot.slane %v84, 2
    %v89 = vsel %vm78, %v84, %v86
    %s91 = scalar_lea.vmem [#allocation7], 4
    %92 = vst [vmem:[%s91] sm:$0xf] %v89
    %v93 = vlaneseq
    %v94 = vand.u32 %v93, 127
    %v95 = vadd.s32 %v94, 128
    %v96 = vadd.s32 %v94, 256
    %v97 = vadd.s32 %v94, 384
    %v98 = vand.u32 %v94, 255
    %v99 = vand.u32 %v95, 255
    %v100 = vand.u32 %v96, 255
    %v101 = vand.u32 %v97, 255
    %v102 = vand.u32 %v98, 15
    %v103 = vand.u32 %v99, 15
    %v104 = vand.u32 %v100, 15
    %v105 = vand.u32 %v101, 15
    %vm106 = vcmp.ge.s32.totalorder %v98, 16
    %vm107 = vcmp.ge.s32.totalorder %v99, 16
    %vm108 = vcmp.ge.s32.totalorder %v100, 16
    %vm109 = vcmp.ge.s32.totalorder %v101, 16
    %vm110 = vcmp.lt.s32.totalorder %v98, 240
    %vm111 = vcmp.lt.s32.totalorder %v99, 240
    %vm112 = vcmp.lt.s32.totalorder %v100, 240
    %vm113 = vcmp.lt.s32.totalorder %v101, 240
    %vm114 = vcmp.ge.s32.totalorder %v102, 1
    %vm115 = vcmp.ge.s32.totalorder %v103, 1
    %vm116 = vcmp.ge.s32.totalorder %v104, 1
    %vm117 = vcmp.ge.s32.totalorder %v105, 1
    %vm118 = vcmp.le.s32.totalorder %v102, 14
    %vm119 = vcmp.le.s32.totalorder %v103, 14
    %vm120 = vcmp.le.s32.totalorder %v104, 14
    %vm121 = vcmp.le.s32.totalorder %v105, 14
    %122 = vrot.lane.b32.xlu0 %v71, 17
    %v123 = vpop.permute.xlu0 %122
    %124 = vrot.lane.b32.xlu0 %v72, 17
    %v125 = vpop.permute.xlu0 %124
    %126 = vrot.lane.b32.xlu0 %v73, 17
    %v127 = vpop.permute.xlu0 %126
    %128 = vrot.lane.b32.xlu0 %v74, 17
    %v129 = vpop.permute.xlu0 %128
    %vm130 = vcmp.lt.s32.totalorder %v94, 17
    %v131 = vsel %vm130, %v127, %v129
    %v132 = vsel %vm130, %v125, %v127
    %v133 = vsel %vm130, %v123, %v125
    %v134 = vsel %vm130, %v129, %v123
    %vm135 = vmand %vm106, %vm114
    %vm136 = vmand %vm107, %vm115
    %vm137 = vmand %vm108, %vm116
    %vm138 = vmand %vm109, %vm117
    %v139 = vsel %vm135, %v134, 0.0
    %v140 = vsel %vm136, %v133, 0.0
    %v141 = vsel %vm137, %v132, 0.0
    %v142 = vsel %vm138, %v131, 0.0
    %143 = vst [vmem:[#allocation2] sm:$0xff] %v139
    %144 = vst [vmem:[#allocation2 + $0x8] sm:$0xff] %v140
    %145 = vst [vmem:[#allocation2 + $0x10] sm:$0xff] %v141
    %146 = vst [vmem:[#allocation2 + $0x18] sm:$0xff] %v142
    %147 = vrot.lane.b32.xlu0 %v71, 16
    %v148 = vpop.permute.xlu0 %147
    %149 = vrot.lane.b32.xlu0 %v72, 16
    %v150 = vpop.permute.xlu0 %149
    %151 = vrot.lane.b32.xlu0 %v73, 16
    %v152 = vpop.permute.xlu0 %151
    %153 = vrot.lane.b32.xlu0 %v74, 16
    %v154 = vpop.permute.xlu0 %153
    %vm155 = vcmp.lt.s32.totalorder %v94, 16
    %v156 = vsel %vm155, %v152, %v154
    %v157 = vsel %vm155, %v150, %v152
    %v158 = vsel %vm155, %v148, %v150
    %v159 = vsel %vm155, %v154, %v148
    %v160 = vsel %vm106, %v159, 0.0
    %v161 = vsel %vm107, %v158, 0.0
    %v162 = vsel %vm108, %v157, 0.0
    %v163 = vsel %vm109, %v156, 0.0
    %164 = vst [vmem:[#allocation2 + $0x20] sm:$0xff] %v160
    %165 = vst [vmem:[#allocation2 + $0x28] sm:$0xff] %v161
    %166 = vst [vmem:[#allocation2 + $0x30] sm:$0xff] %v162
    %167 = vst [vmem:[#allocation2 + $0x38] sm:$0xff] %v163
    %168 = vrot.lane.b32.xlu0 %v71, 15
    %v169 = vpop.permute.xlu0 %168
    %170 = vrot.lane.b32.xlu0 %v72, 15
    %v171 = vpop.permute.xlu0 %170
    %172 = vrot.lane.b32.xlu0 %v73, 15
    %v173 = vpop.permute.xlu0 %172
    %174 = vrot.lane.b32.xlu0 %v74, 15
    %v175 = vpop.permute.xlu0 %174
    %vm176 = vcmp.lt.s32.totalorder %v94, 15
    %v177 = vsel %vm176, %v173, %v175
    %v178 = vsel %vm176, %v171, %v173
    %v179 = vsel %vm176, %v169, %v171
    %v180 = vsel %vm176, %v175, %v169
    %vm181 = vmand %vm106, %vm118
    %vm182 = vmand %vm107, %vm119
    %vm183 = vmand %vm108, %vm120
    %vm184 = vmand %vm109, %vm121
    %v185 = vsel %vm181, %v180, 0.0
    %v186 = vsel %vm182, %v179, 0.0
    %v187 = vsel %vm183, %v178, 0.0
    %v188 = vsel %vm184, %v177, 0.0
    %189 = vst [vmem:[#allocation2 + $0x40] sm:$0xff] %v185
    %190 = vst [vmem:[#allocation2 + $0x48] sm:$0xff] %v186
    %191 = vst [vmem:[#allocation2 + $0x50] sm:$0xff] %v187
    %192 = vst [vmem:[#allocation2 + $0x58] sm:$0xff] %v188
    %193 = vrot.lane.b32.xlu0 %v71, 1
    %v194 = vpop.permute.xlu0 %193
    %195 = vrot.lane.b32.xlu0 %v72, 1
    %v196 = vpop.permute.xlu0 %195
    %197 = vrot.lane.b32.xlu0 %v73, 1
    %v198 = vpop.permute.xlu0 %197
    %199 = vrot.lane.b32.xlu0 %v74, 1
    %v200 = vpop.permute.xlu0 %199
    %vm201 = vcmp.lt.s32.totalorder %v94, 1
    %v202 = vsel %vm201, %v198, %v200
    %v203 = vsel %vm201, %v196, %v198
    %v204 = vsel %vm201, %v194, %v196
    %v205 = vsel %vm201, %v200, %v194
    %v206 = vsel %vm114, %v205, 0.0
    %v207 = vsel %vm115, %v204, 0.0
    %v208 = vsel %vm116, %v203, 0.0
    %v209 = vsel %vm117, %v202, 0.0
    %210 = vst [vmem:[#allocation2 + $0x60] sm:$0xff] %v206
    %211 = vst [vmem:[#allocation2 + $0x68] sm:$0xff] %v207
    %212 = vst [vmem:[#allocation2 + $0x70] sm:$0xff] %v208
    %213 = vst [vmem:[#allocation2 + $0x78] sm:$0xff] %v209
    %214 = vst [vmem:[#allocation2 + $0x80] sm:$0xff] %v71
    %215 = vst [vmem:[#allocation2 + $0x88] sm:$0xff] %v72
    %216 = vst [vmem:[#allocation2 + $0x90] sm:$0xff] %v73
    %217 = vst [vmem:[#allocation2 + $0x98] sm:$0xff] %v74
    %218 = vrot.lane.b32.xlu0 %v71, 127
    %v219 = vpop.permute.xlu0 %218
    %220 = vrot.lane.b32.xlu0 %v72, 127
    %v221 = vpop.permute.xlu0 %220
    %222 = vrot.lane.b32.xlu0 %v73, 127
    %v223 = vpop.permute.xlu0 %222
    %224 = vrot.lane.b32.xlu0 %v74, 127
    %v225 = vpop.permute.xlu0 %224
    %vm226 = vcmp.lt.s32.totalorder %v94, 127
    %v227 = vsel %vm226, %v223, %v225
    %v228 = vsel %vm226, %v221, %v223
    %v229 = vsel %vm226, %v219, %v221
    %v230 = vsel %vm226, %v225, %v219
    %v231 = vsel %vm118, %v229, 0.0
    %v232 = vsel %vm119, %v228, 0.0
    %v233 = vsel %vm120, %v227, 0.0
    %v234 = vsel %vm121, %v230, 0.0
    %235 = vst [vmem:[#allocation2 + $0xa0] sm:$0xff] %v231
    %236 = vst [vmem:[#allocation2 + $0xa8] sm:$0xff] %v232
    %237 = vst [vmem:[#allocation2 + $0xb0] sm:$0xff] %v233
    %238 = vst [vmem:[#allocation2 + $0xb8] sm:$0xff] %v234
    %239 = vrot.lane.b32.xlu0 %v71, 113
    %v240 = vpop.permute.xlu0 %239
    %241 = vrot.lane.b32.xlu0 %v72, 113
    %v242 = vpop.permute.xlu0 %241
    %243 = vrot.lane.b32.xlu0 %v73, 113
    %v244 = vpop.permute.xlu0 %243
    %245 = vrot.lane.b32.xlu0 %v74, 113
    %v246 = vpop.permute.xlu0 %245
    %vm247 = vcmp.lt.s32.totalorder %v94, 113
    %v248 = vsel %vm247, %v244, %v246
    %v249 = vsel %vm247, %v242, %v244
    %v250 = vsel %vm247, %v240, %v242
    %v251 = vsel %vm247, %v246, %v240
    %vm252 = vmand %vm110, %vm114
    %vm253 = vmand %vm111, %vm115
    %vm254 = vmand %vm112, %vm116
    %vm255 = vmand %vm113, %vm117
    %v256 = vsel %vm252, %v250, 0.0
    %v257 = vsel %vm253, %v249, 0.0
    %v258 = vsel %vm254, %v248, 0.0
    %v259 = vsel %vm255, %v251, 0.0
    %260 = vst [vmem:[#allocation2 + $0xc0] sm:$0xff] %v256
    %261 = vst [vmem:[#allocation2 + $0xc8] sm:$0xff] %v257
    %262 = vst [vmem:[#allocation2 + $0xd0] sm:$0xff] %v258
    %263 = vst [vmem:[#allocation2 + $0xd8] sm:$0xff] %v259
    %264 = vrot.lane.b32.xlu0 %v71, 112
    %v265 = vpop.permute.xlu0 %264
    %266 = vrot.lane.b32.xlu0 %v72, 112
    %v267 = vpop.permute.xlu0 %266
    %268 = vrot.lane.b32.xlu0 %v73, 112
    %v269 = vpop.permute.xlu0 %268
    %270 = vrot.lane.b32.xlu0 %v74, 112
    %v271 = vpop.permute.xlu0 %270
    %vm272 = vcmp.lt.s32.totalorder %v94, 112
    %v273 = vsel %vm272, %v269, %v271
    %v274 = vsel %vm272, %v267, %v269
    %v275 = vsel %vm272, %v265, %v267
    %v276 = vsel %vm272, %v271, %v265
    %v277 = vsel %vm110, %v275, 0.0
    %v278 = vsel %vm111, %v274, 0.0
    %v279 = vsel %vm112, %v273, 0.0
    %v280 = vsel %vm113, %v276, 0.0
    %281 = vst [vmem:[#allocation2 + $0xe0] sm:$0xff] %v277
    %282 = vst [vmem:[#allocation2 + $0xe8] sm:$0xff] %v278
    %283 = vst [vmem:[#allocation2 + $0xf0] sm:$0xff] %v279
    %284 = vst [vmem:[#allocation2 + $0xf8] sm:$0xff] %v280
    %285 = vrot.lane.b32.xlu0 %v71, 111
    %v286 = vpop.permute.xlu0 %285
    %287 = vrot.lane.b32.xlu0 %v72, 111
    %v288 = vpop.permute.xlu0 %287
    %289 = vrot.lane.b32.xlu0 %v73, 111
    %v290 = vpop.permute.xlu0 %289
    %291 = vrot.lane.b32.xlu0 %v74, 111
    %v292 = vpop.permute.xlu0 %291
    %vm293 = vcmp.lt.s32.totalorder %v94, 111
    %v294 = vsel %vm293, %v290, %v292
    %v295 = vsel %vm293, %v288, %v290
    %v296 = vsel %vm293, %v286, %v288
    %v297 = vsel %vm293, %v292, %v286
    %vm298 = vmand %vm110, %vm118
    %vm299 = vmand %vm111, %vm119
    %vm300 = vmand %vm112, %vm120
    %vm301 = vmand %vm113, %vm121
    %v302 = vsel %vm298, %v296, 0.0
    %v303 = vsel %vm299, %v295, 0.0
    %v304 = vsel %vm300, %v294, 0.0
    %v305 = vsel %vm301, %v297, 0.0
    %306 = vst [vmem:[#allocation2 + $0x100] sm:$0xff] %v302
    %307 = vst [vmem:[#allocation2 + $0x108] sm:$0xff] %v303
    %308 = vst [vmem:[#allocation2 + $0x110] sm:$0xff] %v304
    %309 = vst [vmem:[#allocation2 + $0x118] sm:$0xff] %v305
    %v310 = vld [vmem:[%s5] sm:$0xf]
    %v311 = vld [vmem:[%s5 + $0x4] sm:$0xf]
    %v312 = vld [vmem:[#allocation2] sm:$0xff]
    %v313 = vld [vmem:[#allocation2 + $0x8] sm:$0xff]
    %v314 = vld [vmem:[#allocation2 + $0x10] sm:$0xff]
    %v315 = vld [vmem:[#allocation2 + $0x18] sm:$0xff]
    %v316 = vld [vmem:[#allocation2 + $0x20] sm:$0xff]
    %v317 = vld [vmem:[#allocation2 + $0x28] sm:$0xff]
    %v318 = vld [vmem:[#allocation2 + $0x30] sm:$0xff]
    %v319 = vld [vmem:[#allocation2 + $0x38] sm:$0xff]
    %v320 = vld [vmem:[#allocation2 + $0x40] sm:$0xff]
    %v321 = vld [vmem:[#allocation2 + $0x48] sm:$0xff]
    %v322 = vld [vmem:[#allocation2 + $0x50] sm:$0xff]
    %v323 = vld [vmem:[#allocation2 + $0x58] sm:$0xff]
    %v324 = vld [vmem:[#allocation2 + $0x60] sm:$0xff]
    %v325 = vld [vmem:[#allocation2 + $0x68] sm:$0xff]
    %v326 = vld [vmem:[#allocation2 + $0x70] sm:$0xff]
    %v327 = vld [vmem:[#allocation2 + $0x78] sm:$0xff]
    %v328 = vld [vmem:[#allocation2 + $0x80] sm:$0xff]
    %v329 = vld [vmem:[#allocation2 + $0x88] sm:$0xff]
    %v330 = vld [vmem:[#allocation2 + $0x90] sm:$0xff]
    %v331 = vld [vmem:[#allocation2 + $0x98] sm:$0xff]
    %v332 = vld [vmem:[#allocation2 + $0xa0] sm:$0xff]
    %v333 = vld [vmem:[#allocation2 + $0xa8] sm:$0xff]
    %v334 = vld [vmem:[#allocation2 + $0xb0] sm:$0xff]
    %v335 = vld [vmem:[#allocation2 + $0xb8] sm:$0xff]
    %v336 = vld [vmem:[#allocation2 + $0xc0] sm:$0xff]
    %v337 = vld [vmem:[#allocation2 + $0xc8] sm:$0xff]
    %v338 = vld [vmem:[#allocation2 + $0xd0] sm:$0xff]
    %v339 = vld [vmem:[#allocation2 + $0xd8] sm:$0xff]
    %v340 = vld [vmem:[#allocation2 + $0xe0] sm:$0xff]
    %v341 = vld [vmem:[#allocation2 + $0xe8] sm:$0xff]
    %v342 = vld [vmem:[#allocation2 + $0xf0] sm:$0xff]
    %v343 = vld [vmem:[#allocation2 + $0xf8] sm:$0xff]
    %v344 = vld [vmem:[#allocation2 + $0x100] sm:$0xff]
    %v345 = vld [vmem:[#allocation2 + $0x108] sm:$0xff]
    %v346 = vld [vmem:[#allocation2 + $0x110] sm:$0xff]
    %v347 = vld [vmem:[#allocation2 + $0x118] sm:$0xff]
    %v348 = vpack.c.bf16 %v316, %v312
    %v349 = vpack.c.bf16 %v317, %v313
    %v350 = vpack.c.bf16 %v318, %v314
    %v351 = vpack.c.bf16 %v319, %v315
    %v352 = vpack.c.bf16 %v324, %v320
    %v353 = vpack.c.bf16 %v325, %v321
    %v354 = vpack.c.bf16 %v326, %v322
    %v355 = vpack.c.bf16 %v327, %v323
    %v356 = vpack.c.bf16 %v332, %v328
    %v357 = vpack.c.bf16 %v333, %v329
    %v358 = vpack.c.bf16 %v334, %v330
    %v359 = vpack.c.bf16 %v335, %v331
    %v360 = vpack.c.bf16 %v340, %v336
    %v361 = vpack.c.bf16 %v341, %v337
    %v362 = vpack.c.bf16 %v342, %v338
    %v363 = vpack.c.bf16 %v343, %v339
    %v364 = vpack.c.bf16 %v344, %v344
    %v365 = vpack.c.bf16 %v345, %v345
    %v366 = vpack.c.bf16 %v346, %v346
    %v367 = vpack.c.bf16 %v347, %v347
    %v370 = vunpack.c.l.b16 %v310
    %v371 = vunpack.c.l.b16 %v311
    %v372 = vpack.c.b16 %v371, %v370
    %vm373 = vcmask 588800
    %v375 = vsel %vm373, %v372, 0
    %vm377 = vcmask 1043456
    %v379 = vsel %vm377, %v364, 0
    %v382 = vsel %vm377, %v365, 0
    %v385 = vsel %vm377, %v366, 0
    %v388 = vsel %vm377, %v367, 0
    %390 = vmatpush.bf16.msra.mxu0 0
    %391 = vmatpush.bf16.msra.mxu0 0
    %392 = vmatpush.bf16.msra.mxu0 0
    %393 = vmatpush.bf16.msra.mxu0 %v379
    %394 = vmatpush.bf16.msra.mxu0 %v360
    %395 = vmatpush.bf16.msra.mxu0 %v356
    %396 = vmatpush.bf16.msra.mxu0 %v352
    %397 = vmatpush.bf16.msra.mxu0 %v348
    %398 = vmatmul.bf16.gmra.mxu0 %v375
    %v399 = vpop.f32.mrf.mxu0
    %v400 = vadd.f32 0.0, %v399
    %v401 = vpop.f32.mrf.mxu0
    %v402 = vadd.f32 0.0, %v401
    %403 = vdwg.mxu0
    %404 = vmatpush.bf16.msra.mxu0 0
    %405 = vmatpush.bf16.msra.mxu0 0
    %406 = vmatpush.bf16.msra.mxu0 0
    %407 = vmatpush.bf16.msra.mxu0 %v382
    %408 = vmatpush.bf16.msra.mxu0 %v361
    %409 = vmatpush.bf16.msra.mxu0 %v357
    %410 = vmatpush.bf16.msra.mxu0 %v353
    %411 = vmatpush.bf16.msra.mxu0 %v349
    %412 = vmatmul.bf16.gmra.mxu0 %v375
    %v413 = vpop.f32.mrf.mxu0
    %v414 = vadd.f32 0.0, %v413
    %v415 = vpop.f32.mrf.mxu0
    %v416 = vadd.f32 0.0, %v415
    %417 = vdwg.mxu0
    %418 = vmatpush.bf16.msra.mxu0 0
    %419 = vmatpush.bf16.msra.mxu0 0
    %420 = vmatpush.bf16.msra.mxu0 0
    %421 = vmatpush.bf16.msra.mxu0 %v385
    %422 = vmatpush.bf16.msra.mxu0 %v362
    %423 = vmatpush.bf16.msra.mxu0 %v358
    %424 = vmatpush.bf16.msra.mxu0 %v354
    %425 = vmatpush.bf16.msra.mxu0 %v350
    %426 = vmatmul.bf16.gmra.mxu0 %v375
    %v427 = vpop.f32.mrf.mxu0
    %v428 = vadd.f32 0.0, %v427
    %v429 = vpop.f32.mrf.mxu0
    %v430 = vadd.f32 0.0, %v429
    %431 = vdwg.mxu0
    %432 = vmatpush.bf16.msra.mxu0 0
    %433 = vmatpush.bf16.msra.mxu0 0
    %434 = vmatpush.bf16.msra.mxu0 0
    %435 = vmatpush.bf16.msra.mxu0 %v388
    %436 = vmatpush.bf16.msra.mxu0 %v363
    %437 = vmatpush.bf16.msra.mxu0 %v359
    %438 = vmatpush.bf16.msra.mxu0 %v355
    %439 = vmatpush.bf16.msra.mxu0 %v351
    %440 = vmatmul.bf16.gmra.mxu0 %v375
    %v441 = vpop.f32.mrf.mxu0
    %v442 = vadd.f32 0.0, %v441
    %v443 = vpop.f32.mrf.mxu0
    %v444 = vadd.f32 0.0, %v443
    %445 = vdwg.mxu0
    %v446 = vld [vmem:[%s3] sm:$0xff]
    %448 = vset.pattern.permute.xlu0 0
    %449 = vperm.xlu0 %448, %v446
    %v450 = vpop.permute.xlu0 %449
    %v452 = vmul.f32 %v400, %v450
    %v453 = vmul.f32 %v414, %v450
    %v454 = vmul.f32 %v428, %v450
    %v455 = vmul.f32 %v442, %v450
    %v456 = vld [vmem:[%s4] sm:$0xff]
    %458 = vset.pattern.permute.xlu0 0
    %459 = vperm.xlu0 %458, %v456
    %v460 = vpop.permute.xlu0 %459
    %v462 = vadd.f32 %v452, %v460
    %v463 = vadd.f32 %v453, %v460
    %v464 = vadd.f32 %v454, %v460
    %v465 = vadd.f32 %v455, %v460
    %v466 = vmax.f32 %v462, 0.0
    %v467 = vmax.f32 %v463, 0.0
    %v468 = vmax.f32 %v464, 0.0
    %v469 = vmax.f32 %v465, 0.0
    %v470 = vpack.c.bf16 %v467, %v466
    %471 = vst [vmem:[#allocation8] sm:$0xff] %v470
    %v472 = vpack.c.bf16 %v469, %v468
    %s473 = scalar_lea.vmem [#allocation8], 8
    %474 = vst [vmem:[%s473] sm:$0xff] %v472
    %475 = vrot.lane.b32.xlu0 %v466, 17
    %v476 = vpop.permute.xlu0 %475
    %477 = vrot.lane.b32.xlu0 %v467, 17
    %v478 = vpop.permute.xlu0 %477
    %479 = vrot.lane.b32.xlu0 %v468, 17
    %v480 = vpop.permute.xlu0 %479
    %481 = vrot.lane.b32.xlu0 %v469, 17
    %v482 = vpop.permute.xlu0 %481
    %v483 = vsel %vm130, %v480, %v482
    %v484 = vsel %vm130, %v478, %v480
    %v485 = vsel %vm130, %v476, %v478
    %v486 = vsel %vm130, %v482, %v476
    %v487 = vsel %vm135, %v486, 0.0
    %v488 = vsel %vm136, %v485, 0.0
    %v489 = vsel %vm137, %v484, 0.0
    %v490 = vsel %vm138, %v483, 0.0
    %491 = vst [vmem:[#allocation3] sm:$0xff] %v487
    %492 = vst [vmem:[#allocation3 + $0x8] sm:$0xff] %v488
    %493 = vst [vmem:[#allocation3 + $0x10] sm:$0xff] %v489
    %494 = vst [vmem:[#allocation3 + $0x18] sm:$0xff] %v490
    %495 = vrot.lane.b32.xlu0 %v466, 16
    %v496 = vpop.permute.xlu0 %495
    %497 = vrot.lane.b32.xlu0 %v467, 16
    %v498 = vpop.permute.xlu0 %497
    %499 = vrot.lane.b32.xlu0 %v468, 16
    %v500 = vpop.permute.xlu0 %499
    %501 = vrot.lane.b32.xlu0 %v469, 16
    %v502 = vpop.permute.xlu0 %501
    %v503 = vsel %vm155, %v500, %v502
    %v504 = vsel %vm155, %v498, %v500
    %v505 = vsel %vm155, %v496, %v498
    %v506 = vsel %vm155, %v502, %v496
    %v507 = vsel %vm106, %v506, 0.0
    %v508 = vsel %vm107, %v505, 0.0
    %v509 = vsel %vm108, %v504, 0.0
    %v510 = vsel %vm109, %v503, 0.0
    %511 = vst [vmem:[#allocation3 + $0x20] sm:$0xff] %v507
    %512 = vst [vmem:[#allocation3 + $0x28] sm:$0xff] %v508
    %513 = vst [vmem:[#allocation3 + $0x30] sm:$0xff] %v509
    %514 = vst [vmem:[#allocation3 + $0x38] sm:$0xff] %v510
    %515 = vrot.lane.b32.xlu0 %v466, 15
    %v516 = vpop.permute.xlu0 %515
    %517 = vrot.lane.b32.xlu0 %v467, 15
    %v518 = vpop.permute.xlu0 %517
    %519 = vrot.lane.b32.xlu0 %v468, 15
    %v520 = vpop.permute.xlu0 %519
    %521 = vrot.lane.b32.xlu0 %v469, 15
    %v522 = vpop.permute.xlu0 %521
    %v523 = vsel %vm176, %v520, %v522
    %v524 = vsel %vm176, %v518, %v520
    %v525 = vsel %vm176, %v516, %v518
    %v526 = vsel %vm176, %v522, %v516
    %v527 = vsel %vm181, %v526, 0.0
    %v528 = vsel %vm182, %v525, 0.0
    %v529 = vsel %vm183, %v524, 0.0
    %v530 = vsel %vm184, %v523, 0.0
    %531 = vst [vmem:[#allocation3 + $0x40] sm:$0xff] %v527
    %532 = vst [vmem:[#allocation3 + $0x48] sm:$0xff] %v528
    %533 = vst [vmem:[#allocation3 + $0x50] sm:$0xff] %v529
    %534 = vst [vmem:[#allocation3 + $0x58] sm:$0xff] %v530
    %535 = vrot.lane.b32.xlu0 %v466, 1
    %v536 = vpop.permute.xlu0 %535
    %537 = vrot.lane.b32.xlu0 %v467, 1
    %v538 = vpop.permute.xlu0 %537
    %539 = vrot.lane.b32.xlu0 %v468, 1
    %v540 = vpop.permute.xlu0 %539
    %541 = vrot.lane.b32.xlu0 %v469, 1
    %v542 = vpop.permute.xlu0 %541
    %v543 = vsel %vm201, %v540, %v542
    %v544 = vsel %vm201, %v538, %v540
    %v545 = vsel %vm201, %v536, %v538
    %v546 = vsel %vm201, %v542, %v536
    %v547 = vsel %vm114, %v546, 0.0
    %v548 = vsel %vm115, %v545, 0.0
    %v549 = vsel %vm116, %v544, 0.0
    %v550 = vsel %vm117, %v543, 0.0
    %551 = vst [vmem:[#allocation3 + $0x60] sm:$0xff] %v547
    %552 = vst [vmem:[#allocation3 + $0x68] sm:$0xff] %v548
    %553 = vst [vmem:[#allocation3 + $0x70] sm:$0xff] %v549
    %554 = vst [vmem:[#allocation3 + $0x78] sm:$0xff] %v550
    %555 = vst [vmem:[#allocation3 + $0x80] sm:$0xff] %v466
    %556 = vst [vmem:[#allocation3 + $0x88] sm:$0xff] %v467
    %557 = vst [vmem:[#allocation3 + $0x90] sm:$0xff] %v468
    %558 = vst [vmem:[#allocation3 + $0x98] sm:$0xff] %v469
    %559 = vrot.lane.b32.xlu0 %v466, 127
    %v560 = vpop.permute.xlu0 %559
    %561 = vrot.lane.b32.xlu0 %v467, 127
    %v562 = vpop.permute.xlu0 %561
    %563 = vrot.lane.b32.xlu0 %v468, 127
    %v564 = vpop.permute.xlu0 %563
    %565 = vrot.lane.b32.xlu0 %v469, 127
    %v566 = vpop.permute.xlu0 %565
    %v567 = vsel %vm226, %v564, %v566
    %v568 = vsel %vm226, %v562, %v564
    %v569 = vsel %vm226, %v560, %v562
    %v570 = vsel %vm226, %v566, %v560
    %v571 = vsel %vm118, %v569, 0.0
    %v572 = vsel %vm119, %v568, 0.0
    %v573 = vsel %vm120, %v567, 0.0
    %v574 = vsel %vm121, %v570, 0.0
    %575 = vst [vmem:[#allocation3 + $0xa0] sm:$0xff] %v571
    %576 = vst [vmem:[#allocation3 + $0xa8] sm:$0xff] %v572
    %577 = vst [vmem:[#allocation3 + $0xb0] sm:$0xff] %v573
    %578 = vst [vmem:[#allocation3 + $0xb8] sm:$0xff] %v574
    %579 = vrot.lane.b32.xlu0 %v466, 113
    %v580 = vpop.permute.xlu0 %579
    %581 = vrot.lane.b32.xlu0 %v467, 113
    %v582 = vpop.permute.xlu0 %581
    %583 = vrot.lane.b32.xlu0 %v468, 113
    %v584 = vpop.permute.xlu0 %583
    %585 = vrot.lane.b32.xlu0 %v469, 113
    %v586 = vpop.permute.xlu0 %585
    %v587 = vsel %vm247, %v584, %v586
    %v588 = vsel %vm247, %v582, %v584
    %v589 = vsel %vm247, %v580, %v582
    %v590 = vsel %vm247, %v586, %v580
    %v591 = vsel %vm252, %v589, 0.0
    %v592 = vsel %vm253, %v588, 0.0
    %v593 = vsel %vm254, %v587, 0.0
    %v594 = vsel %vm255, %v590, 0.0
    %595 = vst [vmem:[#allocation3 + $0xc0] sm:$0xff] %v591
    %596 = vst [vmem:[#allocation3 + $0xc8] sm:$0xff] %v592
    %597 = vst [vmem:[#allocation3 + $0xd0] sm:$0xff] %v593
    %598 = vst [vmem:[#allocation3 + $0xd8] sm:$0xff] %v594
    %599 = vrot.lane.b32.xlu0 %v466, 112
    %v600 = vpop.permute.xlu0 %599
    %601 = vrot.lane.b32.xlu0 %v467, 112
    %v602 = vpop.permute.xlu0 %601
    %603 = vrot.lane.b32.xlu0 %v468, 112
    %v604 = vpop.permute.xlu0 %603
    %605 = vrot.lane.b32.xlu0 %v469, 112
    %v606 = vpop.permute.xlu0 %605
    %v607 = vsel %vm272, %v604, %v606
    %v608 = vsel %vm272, %v602, %v604
    %v609 = vsel %vm272, %v600, %v602
    %v610 = vsel %vm272, %v606, %v600
    %v611 = vsel %vm110, %v609, 0.0
    %v612 = vsel %vm111, %v608, 0.0
    %v613 = vsel %vm112, %v607, 0.0
    %v614 = vsel %vm113, %v610, 0.0
    %615 = vst [vmem:[#allocation3 + $0xe0] sm:$0xff] %v611
    %616 = vst [vmem:[#allocation3 + $0xe8] sm:$0xff] %v612
    %617 = vst [vmem:[#allocation3 + $0xf0] sm:$0xff] %v613
    %618 = vst [vmem:[#allocation3 + $0xf8] sm:$0xff] %v614
    %619 = vrot.lane.b32.xlu0 %v466, 111
    %v620 = vpop.permute.xlu0 %619
    %621 = vrot.lane.b32.xlu0 %v467, 111
    %v622 = vpop.permute.xlu0 %621
    %623 = vrot.lane.b32.xlu0 %v468, 111
    %v624 = vpop.permute.xlu0 %623
    %625 = vrot.lane.b32.xlu0 %v469, 111
    %v626 = vpop.permute.xlu0 %625
    %v627 = vsel %vm293, %v624, %v626
    %v628 = vsel %vm293, %v622, %v624
    %v629 = vsel %vm293, %v620, %v622
    %v630 = vsel %vm293, %v626, %v620
    %v631 = vsel %vm298, %v629, 0.0
    %v632 = vsel %vm299, %v628, 0.0
    %v633 = vsel %vm300, %v627, 0.0
    %v634 = vsel %vm301, %v630, 0.0
    %635 = vst [vmem:[#allocation3 + $0x100] sm:$0xff] %v631
    %636 = vst [vmem:[#allocation3 + $0x108] sm:$0xff] %v632
    %637 = vst [vmem:[#allocation3 + $0x110] sm:$0xff] %v633
    %638 = vst [vmem:[#allocation3 + $0x118] sm:$0xff] %v634
    %v639 = vld [vmem:[#allocation4] sm:$0xf]
    %v640 = vld [vmem:[#allocation3] sm:$0xff]
    %v641 = vld [vmem:[#allocation3 + $0x8] sm:$0xff]
    %v642 = vld [vmem:[#allocation3 + $0x10] sm:$0xff]
    %v643 = vld [vmem:[#allocation3 + $0x18] sm:$0xff]
    %v644 = vld [vmem:[#allocation3 + $0x20] sm:$0xff]
    %v645 = vld [vmem:[#allocation3 + $0x28] sm:$0xff]
    %v646 = vld [vmem:[#allocation3 + $0x30] sm:$0xff]
    %v647 = vld [vmem:[#allocation3 + $0x38] sm:$0xff]
    %v648 = vld [vmem:[#allocation3 + $0x40] sm:$0xff]
    %v649 = vld [vmem:[#allocation3 + $0x48] sm:$0xff]
    %v650 = vld [vmem:[#allocation3 + $0x50] sm:$0xff]
    %v651 = vld [vmem:[#allocation3 + $0x58] sm:$0xff]
    %v652 = vld [vmem:[#allocation3 + $0x60] sm:$0xff]
    %v653 = vld [vmem:[#allocation3 + $0x68] sm:$0xff]
    %v654 = vld [vmem:[#allocation3 + $0x70] sm:$0xff]
    %v655 = vld [vmem:[#allocation3 + $0x78] sm:$0xff]
    %v656 = vld [vmem:[#allocation3 + $0x80] sm:$0xff]
    %v657 = vld [vmem:[#allocation3 + $0x88] sm:$0xff]
    %v658 = vld [vmem:[#allocation3 + $0x90] sm:$0xff]
    %v659 = vld [vmem:[#allocation3 + $0x98] sm:$0xff]
    %v660 = vld [vmem:[#allocation3 + $0xa0] sm:$0xff]
    %v661 = vld [vmem:[#allocation3 + $0xa8] sm:$0xff]
    %v662 = vld [vmem:[#allocation3 + $0xb0] sm:$0xff]
    %v663 = vld [vmem:[#allocation3 + $0xb8] sm:$0xff]
    %v664 = vld [vmem:[#allocation3 + $0xc0] sm:$0xff]
    %v665 = vld [vmem:[#allocation3 + $0xc8] sm:$0xff]
    %v666 = vld [vmem:[#allocation3 + $0xd0] sm:$0xff]
    %v667 = vld [vmem:[#allocation3 + $0xd8] sm:$0xff]
    %v668 = vld [vmem:[#allocation3 + $0xe0] sm:$0xff]
    %v669 = vld [vmem:[#allocation3 + $0xe8] sm:$0xff]
    %v670 = vld [vmem:[#allocation3 + $0xf0] sm:$0xff]
    %v671 = vld [vmem:[#allocation3 + $0xf8] sm:$0xff]
    %v672 = vld [vmem:[#allocation3 + $0x100] sm:$0xff]
    %v673 = vld [vmem:[#allocation3 + $0x108] sm:$0xff]
    %v674 = vld [vmem:[#allocation3 + $0x110] sm:$0xff]
    %v675 = vld [vmem:[#allocation3 + $0x118] sm:$0xff]
    %v676 = vpack.c.bf16 %v644, %v640
    %v677 = vpack.c.bf16 %v645, %v641
    %v678 = vpack.c.bf16 %v646, %v642
    %v679 = vpack.c.bf16 %v647, %v643
    %v680 = vpack.c.bf16 %v652, %v648
    %v681 = vpack.c.bf16 %v653, %v649
    %v682 = vpack.c.bf16 %v654, %v650
    %v683 = vpack.c.bf16 %v655, %v651
    %v684 = vpack.c.bf16 %v660, %v656
    %v685 = vpack.c.bf16 %v661, %v657
    %v686 = vpack.c.bf16 %v662, %v658
    %v687 = vpack.c.bf16 %v663, %v659
    %v688 = vpack.c.bf16 %v668, %v664
    %v689 = vpack.c.bf16 %v669, %v665
    %v690 = vpack.c.bf16 %v670, %v666
    %v691 = vpack.c.bf16 %v671, %v667
    %v692 = vpack.c.bf16 %v672, %v672
    %v693 = vpack.c.bf16 %v673, %v673
    %v694 = vpack.c.bf16 %v674, %v674
    %v695 = vpack.c.bf16 %v675, %v675
    %v697 = vsel %vm373, %v639, 0
    %v700 = vsel %vm377, %v692, 0
    %v703 = vsel %vm377, %v693, 0
    %v706 = vsel %vm377, %v694, 0
    %v709 = vsel %vm377, %v695, 0
    %711 = vmatpush.bf16.msra.mxu0 0
    %712 = vmatpush.bf16.msra.mxu0 0
    %713 = vmatpush.bf16.msra.mxu0 0
    %714 = vmatpush.bf16.msra.mxu0 %v700
    %715 = vmatpush.bf16.msra.mxu0 %v688
    %716 = vmatpush.bf16.msra.mxu0 %v684
    %717 = vmatpush.bf16.msra.mxu0 %v680
    %718 = vmatpush.bf16.msra.mxu0 %v676
    %719 = vmatmul.bf16.gmra.mxu0 %v697
    %v720 = vpop.f32.mrf.mxu0
    %v721 = vadd.f32 %v402, %v720
    %v722 = vpop.f32.mrf.mxu0
    %723 = vdwg.mxu0
    %724 = vmatpush.bf16.msra.mxu0 0
    %725 = vmatpush.bf16.msra.mxu0 0
    %726 = vmatpush.bf16.msra.mxu0 0
    %727 = vmatpush.bf16.msra.mxu0 %v703
    %728 = vmatpush.bf16.msra.mxu0 %v689
    %729 = vmatpush.bf16.msra.mxu0 %v685
    %730 = vmatpush.bf16.msra.mxu0 %v681
    %731 = vmatpush.bf16.msra.mxu0 %v677
    %732 = vmatmul.bf16.gmra.mxu0 %v697
    %v733 = vpop.f32.mrf.mxu0
    %v734 = vadd.f32 %v416, %v733
    %v735 = vpop.f32.mrf.mxu0
    %736 = vdwg.mxu0
    %737 = vmatpush.bf16.msra.mxu0 0
    %738 = vmatpush.bf16.msra.mxu0 0
    %739 = vmatpush.bf16.msra.mxu0 0
    %740 = vmatpush.bf16.msra.mxu0 %v706
    %741 = vmatpush.bf16.msra.mxu0 %v690
    %742 = vmatpush.bf16.msra.mxu0 %v686
    %743 = vmatpush.bf16.msra.mxu0 %v682
    %744 = vmatpush.bf16.msra.mxu0 %v678
    %745 = vmatmul.bf16.gmra.mxu0 %v697
    %v746 = vpop.f32.mrf.mxu0
    %v747 = vadd.f32 %v430, %v746
    %v748 = vpop.f32.mrf.mxu0
    %749 = vdwg.mxu0
    %750 = vmatpush.bf16.msra.mxu0 0
    %751 = vmatpush.bf16.msra.mxu0 0
    %752 = vmatpush.bf16.msra.mxu0 0
    %753 = vmatpush.bf16.msra.mxu0 %v709
    %754 = vmatpush.bf16.msra.mxu0 %v691
    %755 = vmatpush.bf16.msra.mxu0 %v687
    %756 = vmatpush.bf16.msra.mxu0 %v683
    %757 = vmatpush.bf16.msra.mxu0 %v679
    %758 = vmatmul.bf16.gmra.mxu0 %v697
    %v759 = vpop.f32.mrf.mxu0
    %v760 = vadd.f32 %v444, %v759
    %v761 = vpop.f32.mrf.mxu0
    %762 = vdwg.mxu0
    %763 = vst [vmem:[#allocation10] sm:$0xff] %v721
    %764 = vst [vmem:[#allocation10 + $0x8] sm:$0xff] %v734
    %s765 = scalar_lea.vmem [#allocation10], 16
    %766 = vst [vmem:[%s765] sm:$0xff] %v747
    %767 = vst [vmem:[%s765 + $0x8] sm:$0xff] %v760
    // Predicated region
    $region34: #{tpu_custom_call.1} parent=1 // pred_check
      _
    $region35: #{tpu_custom_call.1} parent=1 // pred_check_branch
      %769 = sbr.rel (0) target = $region37
    $region36: #{tpu_custom_call.1} parent=1 // pred_region
      %771 = vsyncadd [#allocation6], 0
      %s772 = sshll.u32 [#allocation7], 4
      %s773 = int_to_ptr.vmem [resolvable:$true] %s772
      %s774 = sshll.u32 %s7, 4
      %s775 = int_to_ptr.hbm [resolvable:$true] %s774
      %780 = dma.vmem_to_hbm [thread:$0]  %s773, 128, %s775, [#allocation6], 64, 64, 4
    $region37: #{tpu_custom_call.1} parent=1 // pred_fallthru
      _
    // Predicated region
    $region38: #{tpu_custom_call.1} parent=1 // pred_check
      _
    $region39: #{tpu_custom_call.1} parent=1 // pred_check_branch
      %782 = sbr.rel (0) target = $region41
    $region40: #{tpu_custom_call.1} parent=1 // pred_region
      %784 = vsyncadd [#allocation9], 0
      %s785 = sshll.u32 [#allocation8], 4
      %s786 = int_to_ptr.vmem [resolvable:$true] %s785
      %s787 = sshll.u32 %s8, 4
      %s788 = int_to_ptr.hbm [resolvable:$true] %s787
      %793 = dma.vmem_to_hbm [thread:$0]  %s786, 256, %s788, [#allocation9], 128, 128, 8
    $region41: #{tpu_custom_call.1} parent=1 // pred_fallthru
      _
    // Predicated region
    $region42: #{tpu_custom_call.1} parent=1 // pred_check
      _
    $region43: #{tpu_custom_call.1} parent=1 // pred_check_branch
      %795 = sbr.rel (0) target = $region45
    $region44: #{tpu_custom_call.1} parent=1 // pred_region
      %797 = vsyncadd [#allocation9], 0
      %s798 = sshll.u32 [#allocation10], 4
      %s799 = int_to_ptr.vmem [resolvable:$true] %s798
      %s800 = sshll.u32 %s9, 4
      %s801 = int_to_ptr.hbm [resolvable:$true] %s800
      %806 = dma.vmem_to_hbm [thread:$0]  %s799, 512, %s801, [#allocation9], 256, 256, 16
    $region45: #{tpu_custom_call.1} parent=1 // pred_fallthru
      _
    // Predicated region
    $region46: #{tpu_custom_call.1} parent=1 // pred_check
      _
    $region47: #{tpu_custom_call.1} parent=1 // pred_check_branch
      %808 = sbr.rel (0) target = $region49
    $region48: #{tpu_custom_call.1} parent=1 // pred_region
      %810 = dma.done [#allocation6], 128
    $region49: #{tpu_custom_call.1} parent=1 // pred_fallthru
      _
    // Predicated region
    $region50: #{tpu_custom_call.1} parent=1 // pred_check
      _
    $region51: #{tpu_custom_call.1} parent=1 // pred_check_branch
      %812 = sbr.rel (0) target = $region53
    $region52: #{tpu_custom_call.1} parent=1 // pred_region
      %814 = dma.done [#allocation9], 256
    $region53: #{tpu_custom_call.1} parent=1 // pred_fallthru
      _
    // Predicated region
    $region54: #{tpu_custom_call.1} parent=1 // pred_check
      _
    $region55: #{tpu_custom_call.1} parent=1 // pred_check_branch
      %816 = sbr.rel (0) target = $region57
    $region56: #{tpu_custom_call.1} parent=1 // pred_region
      %818 = dma.done [#allocation9], 512
    $region57: #{tpu_custom_call.1} parent=1 // pred_fallthru
      _
    %819 = vsyncpa [#allocation5], 1
    %820 = vsyncpa [#allocation6], 1
    %821 = vsyncpa [#allocation9], 1

</llo_original>
